<compile_context>
chip_gen: v7x
topology: tpu7x:2x2x1
jax: 0.10.0
libtpu: 0.0.40
codegen_flags: <defaults>
</compile_context>

<pallas_src>
import functools
import math

import jax
import jax.numpy as jnp
from jax.experimental import pallas as pl
from jax.experimental.pallas import tpu as pltpu

_MIB = 1024 * 1024


# ---------------------------------------------------------------------------
# Import-time feature / hardware detection
# ---------------------------------------------------------------------------
def _detect_weight_pipeline_mode():
    """Feature-detect BlockSpec(pipeline_mode=pl.Buffered(1)) support once."""
    if not hasattr(pl, "Buffered"):
        return None
    try:
        pl.BlockSpec((8, 128), lambda b: (0, 0), pipeline_mode=pl.Buffered(1))
        return pl.Buffered(1)
    except Exception:
        return None


_WEIGHT_PIPELINE_MODE = _detect_weight_pipeline_mode()


def _vmem_capacity_bytes():
    """Physical VMEM per TensorCore; conservative (v7x-class) fallback."""
    try:
        return int(pltpu.get_tpu_info().vmem_capacity_bytes)
    except Exception:
        return 64 * _MIB


# ---------------------------------------------------------------------------
# Kernel
# ---------------------------------------------------------------------------
def embed_guiding_kernel(bias1_ref, f_ref, w1f_ref, w2_ref, out_ref,
                         *, p_real, mxu_dtype, approx_recip):
    # bias1_ref: (TB, 1, D1)   per-image bias = s_fc @ W1s^T + b1         (f32)
    # f_ref    : (TB, Pp, C)   feature map, channels-last, P padded to 8x
    # w1f_ref  : (C, D1)       conv1024 weight slice acting on f (transposed)
    # w2_ref   : (D1, C)       conv2048 weight (transposed)
    # out_ref  : (TB, Pp, C)
    tb, p_pad, c = f_ref.shape
    d1 = w1f_ref.shape[1]

    f = f_ref[...]                                            # (TB, Pp, C)

    # conv1024 (1x1) on cat([s, f], channels) == f @ W1f^T + bias1
    # MXU in mxu_dtype (bf16 by default), f32 accumulation.
    f_mxu = f.astype(mxu_dtype).reshape(tb * p_pad, c)        # free view (Pp % 8 == 0)
    h1 = jnp.dot(f_mxu, w1f_ref[...], preferred_element_type=jnp.float32)
    t = jnp.tanh(h1.reshape(tb, p_pad, d1) + bias1_ref[...])  # (TB, Pp, D1) f32

    # conv2048 (1x1); its bias is dropped (softmax over spatial axis is
    # invariant to a per-(image, channel) constant).
    h2 = jnp.dot(t.reshape(tb * p_pad, d1).astype(mxu_dtype), w2_ref[...],
                 preferred_element_type=jnp.float32).reshape(tb, p_pad, c)

    if p_pad != p_real:
        # Zero-padded spatial rows would otherwise corrupt the softmax denom.
        row = jax.lax.broadcasted_iota(jnp.int32, (1, p_pad, 1), 1)
        h2 = jnp.where(row < p_real, h2, jnp.float32(-1e30))

    # softmax over spatial positions per (image, channel)
    m = jnp.max(h2, axis=1, keepdims=True)                    # (TB, 1, C)
    e = jnp.exp(h2 - m)                                       # (TB, Pp, C)
    denom = jnp.sum(e, axis=1, keepdims=True)                 # (TB, 1, C)
    prior = e * pl.reciprocal(denom, approx=approx_recip)     # EUP, not VPU divide

    # multiply with the original feature (f32 math) and ReLU
    out_ref[...] = jnp.maximum(f.astype(jnp.float32) * prior, 0.0).astype(out_ref.dtype)


# ---------------------------------------------------------------------------
# Parameter preparation (do once at load time)
# ---------------------------------------------------------------------------
def prepare_embed_guiding_params(params, mxu_dtype=jnp.bfloat16):
    """Transpose / cast the conv weights once (not per forward call)."""
    d1 = params["fc_w"].shape[0]
    w1 = params["conv1_w"][:, :, 0, 0]                        # (D1, D1 + C); cat = [s, f]
    return {
        "fc_w": params["fc_w"].astype(jnp.float32),           # (D1, num_classes)
        "fc_b": params["fc_b"].astype(jnp.float32),           # (D1,)
        "w1s_t": jnp.transpose(w1[:, :d1]).astype(jnp.float32),   # (D1, D1) s-path
        "conv1_b": params["conv1_b"].astype(jnp.float32),      # (D1,)
        "w1f": jnp.transpose(w1[:, d1:]).astype(mxu_dtype),    # (C, D1)
        "w2": jnp.transpose(params["conv2_w"][:, :, 0, 0]).astype(mxu_dtype),  # (D1, C)
        # conv2_b intentionally dropped: softmax over spatial is shift-invariant.
        "mxu_dtype": mxu_dtype,
    }


# ---------------------------------------------------------------------------
# Wrapper
# ---------------------------------------------------------------------------
def _pick_batch_tile(batch, target):
    """Largest divisor of `batch` <= target, preferring an EVEN number of grid
    steps (v7x shards the parallel axis across 2 TensorCores)."""
    divs = [d for d in range(1, batch + 1) if batch % d == 0 and d <= target]
    even_steps = [d for d in divs if (batch // d) % 2 == 0]
    if even_steps:
        return max(even_steps)
    multi = [d for d in divs if batch // d >= 2]
    return max(multi) if multi else max(divs)


def _weight_spec(shape, pipeline_mode):
    """Grid-invariant (constant block index) 2-D weight spec."""
    index_map = lambda b: (0, 0)
    if pipeline_mode is None:
        return pl.BlockSpec(shape, index_map)
    return pl.BlockSpec(shape, index_map, pipeline_mode=pipeline_mode)


def embed_guiding_pallas(s, f, prepared, *, channels_last=False,
                         approx_recip=True, tb_target=None, out_dtype=None,
                         single_buffer_weights=True):
    """s: (B, num_classes); f: (B, C, H, W) (or (B, H, W, C) if channels_last)."""
    mxu_dtype = prepared["mxu_dtype"]
    if channels_last:
        B, H, W, C = f.shape
    else:
        B, C, H, W = f.shape
    P = H * W

    # ---- tiny XLA glue: fc layer + s-path folded to a per-image bias ----
    s_fc = s.astype(jnp.float32) @ prepared["fc_w"].T + prepared["fc_b"]   # (B, D1)
    D1 = s_fc.shape[1]
    bias1 = (s_fc @ prepared["w1s_t"] + prepared["conv1_b"])[:, None, :]   # (B, 1, D1)

    # channels-last, spatially flattened feature map (lane-dense kernel output)
    if channels_last:
        f_pc = f.reshape(B, P, C)
    else:
        f_pc = jnp.transpose(f.reshape(B, C, P), (0, 2, 1))                # (B, P, C)

    # pad spatial axis to a sublane multiple so in-kernel reshapes are free views
    P_pad = ((P + 7) // 8) * 8
    if P_pad != P:
        f_pc = jnp.pad(f_pc, ((0, 0), (0, P_pad - P), (0, 0)))

    # generation-aware tiling & VMEM limit (v7x: 64 MiB, v5e/v6e: 128 MiB)
    vmem_cap = _vmem_capacity_bytes()
    if tb_target is None:
        tb_target = 8 if vmem_cap <= 64 * _MIB else 16
    tb = _pick_batch_tile(B, tb_target)
    grid = (B // tb,)
    vmem_limit = int(min(vmem_cap - 8 * _MIB, 100 * _MIB))

    weight_mode = _WEIGHT_PIPELINE_MODE if single_buffer_weights else None
    out_dtype = f.dtype if out_dtype is None else out_dtype

    kernel = functools.partial(embed_guiding_kernel, p_real=P,
                               mxu_dtype=mxu_dtype, approx_recip=approx_recip)

    out_pc = pl.pallas_call(
        kernel,
        out_shape=jax.ShapeDtypeStruct((B, P_pad, C), out_dtype),
        grid_spec=pltpu.PrefetchScalarGridSpec(
            num_scalar_prefetch=0,
            grid=grid,
            in_specs=[
                pl.BlockSpec((tb, 1, D1), lambda b: (b, 0, 0)),      # bias1
                pl.BlockSpec((tb, P_pad, C), lambda b: (b, 0, 0)),   # f
                _weight_spec((C, D1), weight_mode),                  # w1f
                _weight_spec((D1, C), weight_mode),                  # w2
            ],
            out_specs=pl.BlockSpec((tb, P_pad, C), lambda b: (b, 0, 0)),
        ),
        compiler_params=pltpu.CompilerParams(
            dimension_semantics=("parallel",),
            vmem_limit_bytes=vmem_limit,
        ),
    )(bias1, f_pc, prepared["w1f"], prepared["w2"])

    if P_pad != P:
        out_pc = out_pc[:, :P, :]
    if channels_last:
        return out_pc.reshape(B, H, W, C)
    return jnp.transpose(out_pc, (0, 2, 1)).reshape(B, C, H, W)


# ---------------------------------------------------------------------------
# Pure-JAX reference (mirror of the torch forward)
# ---------------------------------------------------------------------------
def embed_guiding_reference(s, f, params):
    B, C, H, W = f.shape
    s_fc = s @ params["fc_w"].T + params["fc_b"]                     # (B, D1)
    D1 = s_fc.shape[1]
    s_map = jnp.broadcast_to(s_fc[:, :, None, None], (B, D1, H, W))
    sf = jnp.concatenate([s_map, f], axis=1)                         # (B, D1+C, H, W)
    w1 = params["conv1_w"][:, :, 0, 0]
    h1 = jnp.einsum("oc,bchw->bohw", w1, sf,
                    precision=jax.lax.Precision.HIGHEST) + params["conv1_b"][None, :, None, None]
    t = jnp.tanh(h1)
    w2 = params["conv2_w"][:, :, 0, 0]
    h2 = jnp.einsum("oc,bchw->bohw", w2, t,
                    precision=jax.lax.Precision.HIGHEST) + params["conv2_b"][None, :, None, None]
    flat = h2.reshape(B * C, H * W)
    prior = jax.nn.softmax(flat, axis=1).reshape(B, C, H, W)
    return jnp.maximum(f * prior, 0.0)


def make_params(key, num_classes, d_embed, c_feat):
    """Deterministic synthetic parameters (same shapes as the torch module,
    with 1024 -> d_embed and 2048 -> c_feat for the small test)."""
    k = jax.random.split(key, 6)
    return {
        "fc_w": 0.01 * jax.random.normal(k[0], (d_embed, num_classes), jnp.float32),
        "fc_b": 0.01 * jax.random.normal(k[1], (d_embed,), jnp.float32),
        "conv1_w": math.sqrt(2.0 / d_embed)
        * jax.random.normal(k[2], (d_embed, d_embed + c_feat, 1, 1), jnp.float32),
        "conv1_b": 0.01 * jax.random.normal(k[3], (d_embed,), jnp.float32),
        "conv2_w": math.sqrt(2.0 / c_feat)
        * jax.random.normal(k[4], (c_feat, d_embed, 1, 1), jnp.float32),
        "conv2_b": 0.01 * jax.random.normal(k[5], (c_feat,), jnp.float32),
    }


if __name__ == "__main__":
    # Small shapes consistent with the module (1024 -> 128, 2048 -> 256);
    # spatial 7x7 so the P=49 -> 56 padding/masking path (ResNet production
    # size) is exercised; batch 4 so TB=2, grid=(2,) (even step count).
    B, num_classes, D1, C, H, W = 4, 16, 128, 256, 7, 7

    key = jax.random.PRNGKey(0)
    k_s, k_f, k_p = jax.random.split(key, 3)
    s = jax.random.normal(k_s, (B, num_classes), jnp.float32)
    f = jax.random.normal(k_f, (B, C, H, W), jnp.float32)
    params = make_params(k_p, num_classes, D1, C)

    ref = jax.block_until_ready(embed_guiding_reference(s, f, params))

    # Default fast path: bf16 MXU + approx reciprocal (v5e/v6e/v7x).
    prep_bf16 = prepare_embed_guiding_params(params)          # mxu_dtype=bf16
    out_bf = jax.block_until_ready(embed_guiding_pallas(s, f, prep_bf16))
    assert out_bf.shape == (B, C, H, W)
    assert jnp.allclose(out_bf, ref, atol=2e-2, rtol=5e-2), (
        "bf16 mismatch vs reference, max abs diff = %e"
        % float(jnp.max(jnp.abs(out_bf - ref))))

    # f32 MXU + exact reciprocal: tight check against the reference.
    prep_f32 = prepare_embed_guiding_params(params, mxu_dtype=jnp.float32)
    out_f32 = jax.block_until_ready(
        embed_guiding_pallas(s, f, prep_f32, approx_recip=False))
    assert jnp.allclose(out_f32, ref, atol=1e-3, rtol=1e-3), (
        "f32 mismatch vs reference, max abs diff = %e"
        % float(jnp.max(jnp.abs(out_f32 - ref))))

    # Channels-last entry point (no wrapper NCHW<->NHWC HBM transpose passes).
    f_nhwc = jnp.transpose(f, (0, 2, 3, 1))
    out_cl = jax.block_until_ready(
        embed_guiding_pallas(s, f_nhwc, prep_bf16, channels_last=True))
    assert out_cl.shape == (B, H, W, C)
    assert jnp.allclose(jnp.transpose(out_cl, (0, 3, 1, 2)), ref,
                        atol=2e-2, rtol=5e-2), "channels_last mismatch vs reference"

    print("KERNEL_OK")
</pallas_src>

<mosaic_0001>
module attributes {stable_mosaic.version = 11 : i64} {
  func.func @embed_guiding_kernel(%arg0: i32, %arg1: memref<2x1x128xf32, #tpu.memory_space<vmem>>, %arg2: memref<2x56x256xf32, #tpu.memory_space<vmem>>, %arg3: memref<256x128xbf16, #tpu.memory_space<vmem>>, %arg4: memref<128x256xbf16, #tpu.memory_space<vmem>>, %arg5: memref<2x56x256xf32, #tpu.memory_space<vmem>>) attributes {dimension_semantics = [#tpu.dimension_semantics<parallel>], iteration_bounds = array<i64: 2>, scalar_prefetch = 0 : i64, scratch_operands = 0 : i64, tpu.core_type = #tpu.core_type<tc>, window_params = [{transform_indices = @transform_0, window_bounds = array<i64: 2, 1, 128>}, {transform_indices = @transform_1, window_bounds = array<i64: 2, 56, 256>}, {pipeline_mode = #tpu.pipeline_mode<synchronous>, transform_indices = @transform_2, window_bounds = array<i64: 256, 128>}, {pipeline_mode = #tpu.pipeline_mode<synchronous>, transform_indices = @transform_3, window_bounds = array<i64: 128, 256>}, {transform_indices = @transform_4, window_bounds = array<i64: 2, 56, 256>}]} {
    %c0 = arith.constant 0 : index
    %c0_0 = arith.constant 0 : index
    %c0_1 = arith.constant 0 : index
    %0 = vector.load %arg2[%c0, %c0_0, %c0_1] : memref<2x56x256xf32, #tpu.memory_space<vmem>>, vector<2x56x256xf32>
    %1 = arith.truncf %0 : vector<2x56x256xf32> to vector<2x56x256xbf16>
    %2 = vector.shape_cast %1 : vector<2x56x256xbf16> to vector<112x256xbf16>
    %c0_2 = arith.constant 0 : index
    %c0_3 = arith.constant 0 : index
    %3 = vector.load %arg3[%c0_2, %c0_3] : memref<256x128xbf16, #tpu.memory_space<vmem>>, vector<256x128xbf16>
    %cst = arith.constant dense<0.000000e+00> : vector<112x128xf32>
    %4 = tpu.matmul %2, %3, %cst {dimension_numbers = #tpu.dot_dimension_numbers<[1], [0], [0], [1], [0, 0, 1, 1], [], []>} : vector<112x256xbf16>, vector<256x128xbf16>, vector<112x128xf32> -> vector<112x128xf32>
    %5 = vector.shape_cast %4 : vector<112x128xf32> to vector<2x56x128xf32>
    %c0_4 = arith.constant 0 : index
    %c0_5 = arith.constant 0 : index
    %c0_6 = arith.constant 0 : index
    %6 = vector.load %arg1[%c0_4, %c0_5, %c0_6] : memref<2x1x128xf32, #tpu.memory_space<vmem>>, vector<2x1x128xf32>
    %7 = vector.broadcast %6 : vector<2x1x128xf32> to vector<2x56x128xf32>
    %8 = arith.addf %5, %7 : vector<2x56x128xf32>
    %9 = math.tanh %8 : vector<2x56x128xf32>
    %10 = vector.shape_cast %9 : vector<2x56x128xf32> to vector<112x128xf32>
    %11 = arith.truncf %10 : vector<112x128xf32> to vector<112x128xbf16>
    %c0_7 = arith.constant 0 : index
    %c0_8 = arith.constant 0 : index
    %12 = vector.load %arg4[%c0_7, %c0_8] : memref<128x256xbf16, #tpu.memory_space<vmem>>, vector<128x256xbf16>
    %cst_9 = arith.constant dense<0.000000e+00> : vector<112x256xf32>
    %13 = tpu.matmul %11, %12, %cst_9 {dimension_numbers = #tpu.dot_dimension_numbers<[1], [0], [0], [1], [0, 0, 1, 1], [], []>} : vector<112x128xbf16>, vector<128x256xbf16>, vector<112x256xf32> -> vector<112x256xf32>
    %14 = vector.shape_cast %13 : vector<112x256xf32> to vector<2x56x256xf32>
    %15 = tpu.iota {dimensions = array<i32: 1>} : vector<1x56x1xi32>
    %c49_i32 = arith.constant 49 : i32
    %16 = vector.broadcast %c49_i32 : i32 to vector<1x56x1xi32>
    %17 = arith.cmpi slt, %15, %16 : vector<1x56x1xi32>
    %cst_10 = arith.constant -1.000000e+30 : f32
    %18 = vector.shape_cast %17 : vector<1x56x1xi1> to vector<1x56x1xi1>
    %19 = vector.broadcast %18 : vector<1x56x1xi1> to vector<2x56x256xi1>
    %20 = vector.broadcast %cst_10 : f32 to vector<2x56x256xf32>
    %21 = arith.select %19, %14, %20 : vector<2x56x256xi1>, vector<2x56x256xf32>
    %cst_11 = arith.constant dense<0xFF800000> : vector<2x256xf32>
    %22 = vector.multi_reduction <maximumf>, %21, %cst_11 [1] : vector<2x56x256xf32> to vector<2x256xf32>
    %23 = vector.shape_cast %22 : vector<2x256xf32> to vector<2x1x256xf32>
    %24 = vector.broadcast %23 : vector<2x1x256xf32> to vector<2x56x256xf32>
    %25 = arith.subf %21, %24 : vector<2x56x256xf32>
    %26 = math.exp %25 : vector<2x56x256xf32>
    %cst_12 = arith.constant dense<0.000000e+00> : vector<2x256xf32>
    %27 = vector.multi_reduction <add>, %26, %cst_12 [1] : vector<2x56x256xf32> to vector<2x256xf32>
    %28 = vector.shape_cast %27 : vector<2x256xf32> to vector<2x1x256xf32>
    %29 = tpu.reciprocal %28 {approx = true} : vector<2x1x256xf32> -> vector<2x1x256xf32>
    %30 = vector.broadcast %29 : vector<2x1x256xf32> to vector<2x56x256xf32>
    %31 = arith.mulf %26, %30 : vector<2x56x256xf32>
    %32 = arith.mulf %0, %31 : vector<2x56x256xf32>
    %cst_13 = arith.constant 0.000000e+00 : f32
    %33 = vector.broadcast %cst_13 : f32 to vector<2x56x256xf32>
    %34 = arith.maximumf %32, %33 : vector<2x56x256xf32>
    %c0_14 = arith.constant 0 : index
    %c0_15 = arith.constant 0 : index
    %c0_16 = arith.constant 0 : index
    %35 = vector.load %arg5[%c0_14, %c0_15, %c0_16] : memref<2x56x256xf32, #tpu.memory_space<vmem>>, vector<2x56x256xf32>
    tpu.vector_store %arg5[%c0_14, %c0_15, %c0_16], %34 {strides = array<i32>} : memref<2x56x256xf32, #tpu.memory_space<vmem>>, vector<2x56x256xf32>,
    return
  }
  func.func @transform_0(%arg0: i32) -> (i32, i32, i32) {
    %c0_i32 = arith.constant 0 : i32
    %c0_i32_0 = arith.constant 0 : i32
    %c0_i32_1 = arith.constant 0 : i32
    return %arg0, %c0_i32, %c0_i32_0 : i32, i32, i32
  }
  func.func @transform_1(%arg0: i32) -> (i32, i32, i32) {
    %c0_i32 = arith.constant 0 : i32
    %c0_i32_0 = arith.constant 0 : i32
    %c0_i32_1 = arith.constant 0 : i32
    return %arg0, %c0_i32, %c0_i32_0 : i32, i32, i32
  }
  func.func @transform_2(%arg0: i32) -> (i32, i32) {
    %c0_i32 = arith.constant 0 : i32
    %c0_i32_0 = arith.constant 0 : i32
    %c0_i32_1 = arith.constant 0 : i32
    return %c0_i32, %c0_i32_0 : i32, i32
  }
  func.func @transform_3(%arg0: i32) -> (i32, i32) {
    %c0_i32 = arith.constant 0 : i32
    %c0_i32_0 = arith.constant 0 : i32
    %c0_i32_1 = arith.constant 0 : i32
    return %c0_i32, %c0_i32_0 : i32, i32
  }
  func.func @transform_4(%arg0: i32) -> (i32, i32, i32) {
    %c0_i32 = arith.constant 0 : i32
    %c0_i32_0 = arith.constant 0 : i32
    %c0_i32_1 = arith.constant 0 : i32
    return %arg0, %c0_i32, %c0_i32_0 : i32, i32, i32
  }
}

</mosaic_0001>

<llo_original>
// kernel: tpu_custom_call.1
$region0: #{tpu_custom_call.1}
  #allocation0 [shape = 'u32[]', space=smem, size = 0x4, offset = 0x4, fixed_abs, tag = 'smem constant byte address 0x4 - core index']
  #allocation1 [shape = 'u32[144,128]{1,0:T(1,128)}', space=vmem, size = 0x12000, scoped, tag = 'internal scratch']
  %s0 = inlined_call_operand.hbm [shape: f32[4,1,128], index: 0, kind: input, shape index: {}]
  %s1 = inlined_call_operand.hbm [shape: f32[4,56,256], index: 1, kind: input, shape index: {}]
  %s2 = inlined_call_operand.hbm [shape: bf16[256,128], index: 2, kind: input, shape index: {}]
  %s3 = inlined_call_operand.hbm [shape: bf16[128,256], index: 3, kind: input, shape index: {}]
  %s4 = inlined_call_operand.hbm [shape: f32[4,56,256], index: 4, kind: output, shape index: {}]
  %s5 = sld [smem:[#allocation0]]
  $region65: #{tpu_custom_call.1} parent=0
    _
  %s7 = ssub.s32 1, %s5
  %s8 = scalar_select 0, %s7, %s5
  $region1: #{tpu_custom_call.1} parent=0
    #allocation2 [shape = 'u8[2048]{0}', space=vmem, size = 0x800, scoped, tag = 'input window, operand 0']
    #allocation3 [shape = 's32[2]{0}', space=sflag, size = 0x8, scoped, tag = 'scoped memory for tpu_custom_call.1']
    #allocation4 [shape = 's32[2]{0}', space=sflag, size = 0x8, scoped, tag = 'scoped memory for tpu_custom_call.1']
    #allocation5 [shape = 'u8[229376]{0}', space=vmem, size = 0x38000, scoped, tag = 'input window, operand 1']
    #allocation6 [shape = 's32[2]{0}', space=sflag, size = 0x8, scoped, tag = 'scoped memory for tpu_custom_call.1']
    #allocation7 [shape = 'u8[65536]{0}', space=vmem, size = 0x10000, scoped, tag = 'input window, operand 2, single buffered']
    #allocation8 [shape = 'u8[65536]{0}', space=vmem, size = 0x10000, scoped, tag = 'input window, operand 3, single buffered']
    #allocation9 [shape = 's32[1]{0}', space=sflag, size = 0x4, scoped, tag = 'scoped memory for tpu_custom_call.1']
    #allocation10 [shape = 'u8[229376]{0}', space=vmem, size = 0x38000, scoped, tag = 'output window, operand 0']
    %9 = vsyncpa [#allocation3], 0
    %s10 = scalar_lea.sflag [#allocation3], 1
    %11 = vsyncpa %s10, 0
    %12 = vsyncpa [#allocation6], 0
    %s13 = scalar_lea.sflag [#allocation6], 1
    %14 = vsyncpa %s13, 0
    %15 = vsyncpa [#allocation9], 0
    %16 = vsyncpa [#allocation4], 0
    %s17 = scalar_lea.sflag [#allocation4], 1
    %18 = vsyncpa %s17, 0
    loop: start=0, step=1, limit=4
    $region2: #{tpu_custom_call.1} parent=1 // loop_pre_header
      _
    $region3: #{tpu_custom_call.1} parent=1 // loop_header
      %s20 = sphi 0, %s24
      %p21 = scmp.ge.s32.totalorder %s20, 4
      %s30 = sphi 0, %s32
      %s33 = sphi 0, %s30
      %s34 = sphi 0, %s33
      %s50 = sphi 0, %s34
      %s56 = sphi 0, %s58
      %s59 = sphi 0, %s56
      %s60 = sphi 0, %s59
      %s76 = sphi 0, %s60
      %s80 = sphi 0, %s80
      %s82 = sphi 0, %s80
      %s83 = sphi 0, %s82
      %s97 = sphi 0, %s83
      %s101 = sphi 0, %s101
      %s103 = sphi 0, %s101
      %s104 = sphi 0, %s103
      %s118 = sphi 0, %s104
      %s124 = sphi 0, %s126
      %s127 = sphi 0, %s124
      %s128 = sphi 0, %s127
      %s144 = sphi 0, %s128
    $region4: #{tpu_custom_call.1} parent=1 // loop_header_branch
      %23 = sbr.rel (%p21) target = $region8
    $region5: #{tpu_custom_call.1} parent=1 // loop_body
      %s25 = ssub.s32 %s20, 1
      %s26 = ssub.s32 %s20, 2
      %s27 = sadd.s32 %s20, 1
      %s28 = ssub.s32 %s20, %s27
      %p29 = scmp.eq.s32.totalorder %s28, 0
      %s31 = sadd.s32 %s30, 1
      %s32 = scalar_select %p29, %s30, %s31
      %p35 = pneg %p29
      %p36 = scmp.eq.s32.totalorder %s20, 1
      %p37 = por %p35, %p36
      %p38 = scmp.ne.s32.totalorder %s30, %s33
      %p39 = scmp.eq.s32.totalorder %s20, 0
      %p40 = por %p38, %p39
      %p41 = scmp.ne.s32.totalorder %s30, %s33
      %p42 = scmp.eq.s32.totalorder %s25, 1
      %p43 = por %p41, %p42
      %p44 = scmp.ne.s32.totalorder %s33, %s34
      %p45 = scmp.eq.s32.totalorder %s25, 0
      %p46 = por %p44, %p45
      %p47 = scmp.ne.s32.totalorder %s33, %s34
      %p48 = scmp.eq.s32.totalorder %s26, 1
      %p49 = por %p47, %p48
      %p51 = scmp.ne.s32.totalorder %s34, %s50
      %p52 = scmp.eq.s32.totalorder %s26, 0
      %p53 = por %p51, %p52
      %s54 = ssub.s32 %s20, %s27
      %p55 = scmp.eq.s32.totalorder %s54, 0
      %s57 = sadd.s32 %s56, 1
      %s58 = scalar_select %p55, %s56, %s57
      %p61 = pneg %p55
      %p62 = scmp.eq.s32.totalorder %s20, 1
      %p63 = por %p61, %p62
      %p64 = scmp.ne.s32.totalorder %s56, %s59
      %p65 = scmp.eq.s32.totalorder %s20, 0
      %p66 = por %p64, %p65
      %p67 = scmp.ne.s32.totalorder %s56, %s59
      %p68 = scmp.eq.s32.totalorder %s25, 1
      %p69 = por %p67, %p68
      %p70 = scmp.ne.s32.totalorder %s59, %s60
      %p71 = scmp.eq.s32.totalorder %s25, 0
      %p72 = por %p70, %p71
      %p73 = scmp.ne.s32.totalorder %s59, %s60
      %p74 = scmp.eq.s32.totalorder %s26, 1
      %p75 = por %p73, %p74
      %p77 = scmp.ne.s32.totalorder %s60, %s76
      %p78 = scmp.eq.s32.totalorder %s26, 0
      %p79 = por %p77, %p78
      %s81 = sadd.s32 %s80, 1
      %p84 = scmp.eq.s32.totalorder %s20, 1
      %p85 = scmp.ne.s32.totalorder %s80, %s82
      %p86 = scmp.eq.s32.totalorder %s20, 0
      %p87 = por %p85, %p86
      %p88 = scmp.ne.s32.totalorder %s80, %s82
      %p89 = scmp.eq.s32.totalorder %s25, 1
      %p90 = por %p88, %p89
      %p91 = scmp.ne.s32.totalorder %s82, %s83
      %p92 = scmp.eq.s32.totalorder %s25, 0
      %p93 = por %p91, %p92
      %p94 = scmp.ne.s32.totalorder %s82, %s83
      %p95 = scmp.eq.s32.totalorder %s26, 1
      %p96 = por %p94, %p95
      %p98 = scmp.ne.s32.totalorder %s83, %s97
      %p99 = scmp.eq.s32.totalorder %s26, 0
      %p100 = por %p98, %p99
      %s102 = sadd.s32 %s101, 1
      %p105 = scmp.eq.s32.totalorder %s20, 1
      %p106 = scmp.ne.s32.totalorder %s101, %s103
      %p107 = scmp.eq.s32.totalorder %s20, 0
      %p108 = por %p106, %p107
      %p109 = scmp.ne.s32.totalorder %s101, %s103
      %p110 = scmp.eq.s32.totalorder %s25, 1
      %p111 = por %p109, %p110
      %p112 = scmp.ne.s32.totalorder %s103, %s104
      %p113 = scmp.eq.s32.totalorder %s25, 0
      %p114 = por %p112, %p113
      %p115 = scmp.ne.s32.totalorder %s103, %s104
      %p116 = scmp.eq.s32.totalorder %s26, 1
      %p117 = por %p115, %p116
      %p119 = scmp.ne.s32.totalorder %s104, %s118
      %p120 = scmp.eq.s32.totalorder %s26, 0
      %p121 = por %p119, %p120
      %s122 = ssub.s32 %s20, %s27
      %p123 = scmp.eq.s32.totalorder %s122, 0
      %s125 = sadd.s32 %s124, 1
      %s126 = scalar_select %p123, %s124, %s125
      %p129 = pneg %p123
      %p130 = scmp.eq.s32.totalorder %s20, 1
      %p131 = por %p129, %p130
      %p132 = scmp.ne.s32.totalorder %s124, %s127
      %p133 = scmp.eq.s32.totalorder %s20, 0
      %p134 = por %p132, %p133
      %p135 = scmp.ne.s32.totalorder %s124, %s127
      %p136 = scmp.eq.s32.totalorder %s25, 1
      %p137 = por %p135, %p136
      %p138 = scmp.ne.s32.totalorder %s127, %s128
      %p139 = scmp.eq.s32.totalorder %s25, 0
      %p140 = por %p138, %p139
      %p141 = scmp.ne.s32.totalorder %s127, %s128
      %p142 = scmp.eq.s32.totalorder %s26, 1
      %p143 = por %p141, %p142
      %p145 = scmp.ne.s32.totalorder %s128, %s144
      %p146 = scmp.eq.s32.totalorder %s26, 0
      %p147 = por %p145, %p146
      %p148 = scmp.le.s32.totalorder 1, %s20
      %p149 = scmp.lt.s32.totalorder %s20, 3
      %p150 = pnand %p148, %p149
      %p151 = pneg %p150
      // Predicated region
      $region9: #{tpu_custom_call.1} parent=5 // pred_check
        _
      $region10: #{tpu_custom_call.1} parent=5 // pred_check_branch
        %153 = sbr.rel (%p150) target = $region12
      $region11: #{tpu_custom_call.1} parent=5 // pred_region
        %s154 = ssub.s32 %s20, 1
        // Predicated region
        $region13: #{tpu_custom_call.1} parent=11 // pred_check
          %p155 = pneg %p93
        $region14: #{tpu_custom_call.1} parent=11 // pred_check_branch
          %157 = sbr.rel (%p155) target = $region16
        $region15: #{tpu_custom_call.1} parent=11 // pred_region
          %s159 = ssub.s32 2048, 2048
          %160 = vsyncadd [#allocation6], %s159
          %s161 = sshll.u32 [#allocation7], 4
          %s162 = int_to_ptr.vmem [resolvable:$true] %s161
          %167 = dma.hbm_to_vmem [thread:$0]  %s2, 2048, %s162, [#allocation6], 64, 64, 4
        $region16: #{tpu_custom_call.1} parent=11 // pred_fallthru
          _
        // Predicated region
        $region17: #{tpu_custom_call.1} parent=11 // pred_check
          %p168 = pneg %p114
        $region18: #{tpu_custom_call.1} parent=11 // pred_check_branch
          %170 = sbr.rel (%p168) target = $region20
        $region19: #{tpu_custom_call.1} parent=11 // pred_region
          %s172 = ssub.s32 2048, 2048
          %173 = vsyncadd [#allocation9], %s172
          %s174 = sshll.u32 [#allocation8], 4
          %s175 = int_to_ptr.vmem [resolvable:$true] %s174
          %180 = dma.hbm_to_vmem [thread:$0]  %s3, 2048, %s175, [#allocation9], 128, 128, 8
        $region20: #{tpu_custom_call.1} parent=11 // pred_fallthru
          _
      $region12: #{tpu_custom_call.1} parent=5 // pred_fallthru
        _
      %p181 = scmp.lt.s32.totalorder %s20, 2
      // Predicated region
      $region21: #{tpu_custom_call.1} parent=5 // pred_check
        %p182 = pneg %p181
      $region22: #{tpu_custom_call.1} parent=5 // pred_check_branch
        %184 = sbr.rel (%p182) target = $region24
      $region23: #{tpu_custom_call.1} parent=5 // pred_region
        // Predicated region
        $region25: #{tpu_custom_call.1} parent=23 // pred_check
          %p185 = pneg %p40
        $region26: #{tpu_custom_call.1} parent=23 // pred_check_branch
          %187 = sbr.rel (%p185) target = $region28
        $region27: #{tpu_custom_call.1} parent=23 // pred_region
          %s188 = sand.u32 %s30, 1
          %s189 = scalar_lea.sflag [#allocation3], %s188
          %s190 = sand.u32 %s30, 1
          %s191 = smul.addr %s190, 2
          %s192 = scalar_lea.vmem [#allocation2], %s191
          %s193 = smul.u32 2, %s20
          %s195 = ssub.s32 32, 32
          %196 = vsyncadd %s189, %s195
          %s197 = smul.addr %s193, 16
          %s198 = scalar_lea.hbm %s0, %s197
          %s199 = sshll.u32 %s192, 4
          %s200 = int_to_ptr.vmem [resolvable:$true] %s199
          %205 = dma.hbm_to_vmem [thread:$0]  %s198, 32, %s200, %s189, 16, 16, 1
        $region28: #{tpu_custom_call.1} parent=23 // pred_fallthru
          _
        // Predicated region
        $region29: #{tpu_custom_call.1} parent=23 // pred_check
          %p206 = pneg %p66
        $region30: #{tpu_custom_call.1} parent=23 // pred_check_branch
          %208 = sbr.rel (%p206) target = $region32
        $region31: #{tpu_custom_call.1} parent=23 // pred_region
          %s209 = sand.u32 %s20, 1
          %s210 = scalar_lea.sflag [#allocation6], %s209
          %s211 = sand.u32 %s56, 1
          %s212 = smul.addr %s211, 224
          %s213 = scalar_lea.vmem [#allocation5], %s212
          %s214 = smul.u32 2, %s20
          %s216 = ssub.s32 3584, 3584
          %217 = vsyncadd %s210, %s216
          %s218 = smul.addr %s214, 14
          %s219 = smul.addr %s218, 128
          %s220 = scalar_lea.hbm %s1, %s219
          %s221 = sshll.u32 %s213, 4
          %s222 = int_to_ptr.vmem [resolvable:$true] %s221
          %227 = dma.hbm_to_vmem [thread:$0]  %s220, 3584, %s222, %s210, 256, 256, 16
        $region32: #{tpu_custom_call.1} parent=23 // pred_fallthru
          _
      $region24: #{tpu_custom_call.1} parent=5 // pred_fallthru
        _
      %p228 = scmp.le.s32.totalorder 1, %s20
      %p229 = scmp.lt.s32.totalorder %s20, 3
      %p230 = pnand %p228, %p229
      %p231 = pneg %p230
      // Predicated region
      $region33: #{tpu_custom_call.1} parent=5 // pred_check
        _
      $region34: #{tpu_custom_call.1} parent=5 // pred_check_branch
        %233 = sbr.rel (%p230) target = $region36
      $region35: #{tpu_custom_call.1} parent=5 // pred_region
        %s234 = ssub.s32 %s20, 1
        %s235 = sand.u32 %s33, 1
        %s236 = scalar_lea.sflag [#allocation3], %s235
        %s237 = sand.u32 %s33, 1
        %s238 = smul.addr %s237, 2
        %s239 = scalar_lea.vmem [#allocation2], %s238
        // Predicated region
        $region37: #{tpu_custom_call.1} parent=35 // pred_check
          %p240 = pneg %p46
        $region38: #{tpu_custom_call.1} parent=35 // pred_check_branch
          %242 = sbr.rel (%p240) target = $region40
        $region39: #{tpu_custom_call.1} parent=35 // pred_region
          %243 = dma.done %s236, 32
        $region40: #{tpu_custom_call.1} parent=35 // pred_fallthru
          _
        %s244 = sand.u32 %s25, 1
        %s245 = scalar_lea.sflag [#allocation6], %s244
        %s246 = sand.u32 %s59, 1
        %s247 = smul.addr %s246, 224
        %s248 = scalar_lea.vmem [#allocation5], %s247
        // Predicated region
        $region41: #{tpu_custom_call.1} parent=35 // pred_check
          %p249 = pneg %p72
        $region42: #{tpu_custom_call.1} parent=35 // pred_check_branch
          %251 = sbr.rel (%p249) target = $region44
        $region43: #{tpu_custom_call.1} parent=35 // pred_region
          %252 = dma.done %s245, 3584
        $region44: #{tpu_custom_call.1} parent=35 // pred_fallthru
          _
        // Predicated region
        $region45: #{tpu_custom_call.1} parent=35 // pred_check
          %p253 = pneg %p93
        $region46: #{tpu_custom_call.1} parent=35 // pred_check_branch
          %255 = sbr.rel (%p253) target = $region48
        $region47: #{tpu_custom_call.1} parent=35 // pred_region
          %256 = dma.done [#allocation6], 2048
        $region48: #{tpu_custom_call.1} parent=35 // pred_fallthru
          _
        // Predicated region
        $region49: #{tpu_custom_call.1} parent=35 // pred_check
          %p257 = pneg %p114
        $region50: #{tpu_custom_call.1} parent=35 // pred_check_branch
          %259 = sbr.rel (%p257) target = $region52
        $region51: #{tpu_custom_call.1} parent=35 // pred_region
          %260 = dma.done [#allocation9], 2048
        $region52: #{tpu_custom_call.1} parent=35 // pred_fallthru
          _
        %s261 = sand.u32 %s33, 1
        %s262 = scalar_lea.sflag [#allocation3], %s261
        %s263 = sand.u32 %s33, 1
        %s264 = smul.addr %s263, 2
        %s265 = scalar_lea.vmem [#allocation2], %s264
        %p266 = pneg %p46
        %p267 = pneg %p43
        %s268 = sand.u32 %s25, 1
        %s269 = scalar_lea.sflag [#allocation6], %s268
        %s270 = sand.u32 %s59, 1
        %s271 = smul.addr %s270, 224
        %s272 = scalar_lea.vmem [#allocation5], %s271
        %p273 = pneg %p72
        %p274 = pneg %p69
        %p275 = pneg %p93
        %p276 = pneg %p90
        %p277 = pneg %p114
        %p278 = pneg %p111
        %p279 = pneg %p140
        %p280 = pneg %p137
        %s281 = sand.u32 %s127, 1
        %s282 = scalar_lea.sflag [#allocation4], %s281
        %s283 = sand.u32 %s127, 1
        %s284 = smul.addr %s283, 224
        %s285 = scalar_lea.vmem [#allocation10], %s284
        %s286 = smul.u32 2, %s25
        %s287 = smul.u32 2, %s25
        %s288 = smul.u32 2, %s25
        %v290 = vld [vmem:[%s248] sm:$0xff]
        %v291 = vld [vmem:[%s248 + $0x8] sm:$0xff]
        %v292 = vld [vmem:[%s248 + $0x10] sm:$0xff]
        %v293 = vld [vmem:[%s248 + $0x18] sm:$0xff]
        %v294 = vld [vmem:[%s248 + $0x20] sm:$0xff]
        %v295 = vld [vmem:[%s248 + $0x28] sm:$0xff]
        %v296 = vld [vmem:[%s248 + $0x30] sm:$0xff]
        %v297 = vld [vmem:[%s248 + $0x38] sm:$0xff]
        %v298 = vld [vmem:[%s248 + $0x40] sm:$0xff]
        %v299 = vld [vmem:[%s248 + $0x48] sm:$0xff]
        %v300 = vld [vmem:[%s248 + $0x50] sm:$0xff]
        %v301 = vld [vmem:[%s248 + $0x58] sm:$0xff]
        %v302 = vld [vmem:[%s248 + $0x60] sm:$0xff]
        %v303 = vld [vmem:[%s248 + $0x68] sm:$0xff]
        %v304 = vld [vmem:[%s248 + $0x70] sm:$0xff]
        %v305 = vld [vmem:[%s248 + $0x78] sm:$0xff]
        %v306 = vld [vmem:[%s248 + $0x80] sm:$0xff]
        %v307 = vld [vmem:[%s248 + $0x88] sm:$0xff]
        %v308 = vld [vmem:[%s248 + $0x90] sm:$0xff]
        %v309 = vld [vmem:[%s248 + $0x98] sm:$0xff]
        %v310 = vld [vmem:[%s248 + $0xa0] sm:$0xff]
        %v311 = vld [vmem:[%s248 + $0xa8] sm:$0xff]
        %v312 = vld [vmem:[%s248 + $0xb0] sm:$0xff]
        %v313 = vld [vmem:[%s248 + $0xb8] sm:$0xff]
        %v314 = vld [vmem:[%s248 + $0xc0] sm:$0xff]
        %v315 = vld [vmem:[%s248 + $0xc8] sm:$0xff]
        %v316 = vld [vmem:[%s248 + $0xd0] sm:$0xff]
        %v317 = vld [vmem:[%s248 + $0xd8] sm:$0xff]
        %v318 = vpack.c.bf16 %v292, %v290
        %v319 = vpack.c.bf16 %v293, %v291
        %v320 = vpack.c.bf16 %v296, %v294
        %v321 = vpack.c.bf16 %v297, %v295
        %v322 = vpack.c.bf16 %v300, %v298
        %v323 = vpack.c.bf16 %v301, %v299
        %v324 = vpack.c.bf16 %v302, %v302
        %v325 = vpack.c.bf16 %v303, %v303
        %v326 = vpack.c.bf16 %v306, %v304
        %v327 = vpack.c.bf16 %v307, %v305
        %v328 = vpack.c.bf16 %v310, %v308
        %v329 = vpack.c.bf16 %v311, %v309
        %v330 = vpack.c.bf16 %v314, %v312
        %v331 = vpack.c.bf16 %v315, %v313
        %v332 = vpack.c.bf16 %v316, %v316
        %v333 = vpack.c.bf16 %v317, %v317
        %v350 = vunpack.c.l.b16 %v318
        %v351 = vunpack.c.l.b16 %v319
        %v352 = vunpack.c.h.b16 %v318
        %v353 = vunpack.c.h.b16 %v319
        %v354 = vunpack.c.l.b16 %v320
        %v355 = vunpack.c.l.b16 %v321
        %v356 = vunpack.c.h.b16 %v320
        %v357 = vunpack.c.h.b16 %v321
        %v358 = vunpack.c.l.b16 %v322
        %v359 = vunpack.c.l.b16 %v323
        %v360 = vunpack.c.h.b16 %v322
        %v361 = vunpack.c.h.b16 %v323
        %v362 = vunpack.c.l.b16 %v324
        %v363 = vunpack.c.l.b16 %v325
        %v364 = vunpack.c.l.b16 %v326
        %v365 = vunpack.c.l.b16 %v327
        %v366 = vunpack.c.h.b16 %v326
        %v367 = vunpack.c.h.b16 %v327
        %v368 = vunpack.c.l.b16 %v328
        %v369 = vunpack.c.l.b16 %v329
        %v370 = vunpack.c.h.b16 %v328
        %v371 = vunpack.c.h.b16 %v329
        %v372 = vunpack.c.l.b16 %v330
        %v373 = vunpack.c.l.b16 %v331
        %v374 = vunpack.c.h.b16 %v330
        %v375 = vunpack.c.h.b16 %v331
        %v376 = vunpack.c.l.b16 %v332
        %v377 = vunpack.c.l.b16 %v333
        %v378 = vld [vmem:[#allocation7] sm:$0xf]
        %v379 = vld [vmem:[#allocation7 + $0x4] sm:$0xf]
        %v380 = vld [vmem:[#allocation7 + $0x8] sm:$0xf]
        %v381 = vld [vmem:[#allocation7 + $0xc] sm:$0xf]
        %v382 = vld [vmem:[#allocation7 + $0x10] sm:$0xf]
        %v383 = vld [vmem:[#allocation7 + $0x14] sm:$0xf]
        %v384 = vld [vmem:[#allocation7 + $0x18] sm:$0xf]
        %v385 = vld [vmem:[#allocation7 + $0x1c] sm:$0xf]
        %v386 = vld [vmem:[#allocation7 + $0x20] sm:$0xf]
        %v387 = vld [vmem:[#allocation7 + $0x24] sm:$0xf]
        %v388 = vld [vmem:[#allocation7 + $0x28] sm:$0xf]
        %v389 = vld [vmem:[#allocation7 + $0x2c] sm:$0xf]
        %v390 = vld [vmem:[#allocation7 + $0x30] sm:$0xf]
        %v391 = vld [vmem:[#allocation7 + $0x34] sm:$0xf]
        %v392 = vld [vmem:[#allocation7 + $0x38] sm:$0xf]
        %v393 = vld [vmem:[#allocation7 + $0x3c] sm:$0xf]
        %v394 = vld [vmem:[#allocation7 + $0x40] sm:$0xf]
        %v395 = vld [vmem:[#allocation7 + $0x44] sm:$0xf]
        %v396 = vld [vmem:[#allocation7 + $0x48] sm:$0xf]
        %v397 = vld [vmem:[#allocation7 + $0x4c] sm:$0xf]
        %v398 = vld [vmem:[#allocation7 + $0x50] sm:$0xf]
        %v399 = vld [vmem:[#allocation7 + $0x54] sm:$0xf]
        %v400 = vld [vmem:[#allocation7 + $0x58] sm:$0xf]
        %v401 = vld [vmem:[#allocation7 + $0x5c] sm:$0xf]
        %v402 = vld [vmem:[#allocation7 + $0x60] sm:$0xf]
        %v403 = vld [vmem:[#allocation7 + $0x64] sm:$0xf]
        %v404 = vld [vmem:[#allocation7 + $0x68] sm:$0xf]
        %v405 = vld [vmem:[#allocation7 + $0x6c] sm:$0xf]
        %v406 = vld [vmem:[#allocation7 + $0x70] sm:$0xf]
        %v407 = vld [vmem:[#allocation7 + $0x74] sm:$0xf]
        %v408 = vld [vmem:[#allocation7 + $0x78] sm:$0xf]
        %v409 = vld [vmem:[#allocation7 + $0x7c] sm:$0xf]
        %v410 = vpack.c.b16 %v352, %v350
        %v411 = vpack.c.b16 %v353, %v351
        %v412 = vpack.c.b16 %v356, %v354
        %v413 = vpack.c.b16 %v357, %v355
        %v414 = vpack.c.b16 %v360, %v358
        %v415 = vpack.c.b16 %v361, %v359
        %v416 = vpack.c.b16 %v364, %v362
        %v417 = vpack.c.b16 %v365, %v363
        %v418 = vpack.c.b16 %v368, %v366
        %v419 = vpack.c.b16 %v369, %v367
        %v420 = vpack.c.b16 %v372, %v370
        %v421 = vpack.c.b16 %v373, %v371
        %v422 = vpack.c.b16 %v376, %v374
        %v423 = vpack.c.b16 %v377, %v375
        %v470 = vunpack.c.l.b16 %v378
        %v471 = vunpack.c.l.b16 %v379
        %v472 = vunpack.c.l.b16 %v380
        %v473 = vunpack.c.l.b16 %v381
        %v474 = vunpack.c.l.b16 %v382
        %v475 = vunpack.c.l.b16 %v383
        %v476 = vunpack.c.l.b16 %v384
        %v477 = vunpack.c.l.b16 %v385
        %v478 = vunpack.c.l.b16 %v386
        %v479 = vunpack.c.l.b16 %v387
        %v480 = vunpack.c.l.b16 %v388
        %v481 = vunpack.c.l.b16 %v389
        %v482 = vunpack.c.l.b16 %v390
        %v483 = vunpack.c.l.b16 %v391
        %v484 = vunpack.c.l.b16 %v392
        %v485 = vunpack.c.l.b16 %v393
        %v486 = vunpack.c.l.b16 %v394
        %v487 = vunpack.c.l.b16 %v395
        %v488 = vunpack.c.l.b16 %v396
        %v489 = vunpack.c.l.b16 %v397
        %v490 = vunpack.c.l.b16 %v398
        %v491 = vunpack.c.l.b16 %v399
        %v492 = vunpack.c.l.b16 %v400
        %v493 = vunpack.c.l.b16 %v401
        %v494 = vunpack.c.l.b16 %v402
        %v495 = vunpack.c.l.b16 %v403
        %v496 = vunpack.c.l.b16 %v404
        %v497 = vunpack.c.l.b16 %v405
        %v498 = vunpack.c.l.b16 %v406
        %v499 = vunpack.c.l.b16 %v407
        %v500 = vunpack.c.l.b16 %v408
        %v501 = vunpack.c.l.b16 %v409
        %v502 = vpack.c.b16 %v471, %v470
        %v503 = vpack.c.b16 %v473, %v472
        %v504 = vpack.c.b16 %v475, %v474
        %v505 = vpack.c.b16 %v477, %v476
        %v506 = vpack.c.b16 %v479, %v478
        %v507 = vpack.c.b16 %v481, %v480
        %v508 = vpack.c.b16 %v483, %v482
        %v509 = vpack.c.b16 %v485, %v484
        %v510 = vpack.c.b16 %v487, %v486
        %v511 = vpack.c.b16 %v489, %v488
        %v512 = vpack.c.b16 %v491, %v490
        %v513 = vpack.c.b16 %v493, %v492
        %v514 = vpack.c.b16 %v495, %v494
        %v515 = vpack.c.b16 %v497, %v496
        %v516 = vpack.c.b16 %v499, %v498
        %v517 = vpack.c.b16 %v501, %v500
        %534 = vmatprep.subr.bf16.mxu0 0
        %535 = vmatpush1.bf16.msra.mxu0 %v502
        %536 = vmatprep.subr.bf16.mxu0 0
        %537 = vmatpush1.bf16.msra.mxu0 %v503
        %538 = vmatprep.subr.bf16.mxu0 0
        %539 = vmatpush1.bf16.msra.mxu0 %v504
        %540 = vmatprep.subr.bf16.mxu0 0
        %541 = vmatpush1.bf16.msra.mxu0 %v505
        %542 = vmatprep.subr.bf16.mxu0 0
        %543 = vmatpush1.bf16.msra.mxu0 %v506
        %544 = vmatprep.subr.bf16.mxu0 0
        %545 = vmatpush1.bf16.msra.mxu0 %v507
        %546 = vmatprep.subr.bf16.mxu0 0
        %547 = vmatpush1.bf16.msra.mxu0 %v508
        %548 = vmatprep.subr.bf16.mxu0 0
        %549 = vmatpush1.bf16.msra.mxu0 %v509
        %550 = vmatprep.subr.bf16.mxu0 0
        %551 = vmatpush1.bf16.msra.mxu0 %v510
        %552 = vmatprep.subr.bf16.mxu0 0
        %553 = vmatpush1.bf16.msra.mxu0 %v511
        %554 = vmatprep.subr.bf16.mxu0 0
        %555 = vmatpush1.bf16.msra.mxu0 %v512
        %556 = vmatprep.subr.bf16.mxu0 0
        %557 = vmatpush1.bf16.msra.mxu0 %v513
        %558 = vmatprep.subr.bf16.mxu0 0
        %559 = vmatpush1.bf16.msra.mxu0 %v514
        %560 = vmatprep.subr.bf16.mxu0 0
        %561 = vmatpush1.bf16.msra.mxu0 %v515
        %562 = vmatprep.subr.bf16.mxu0 0
        %563 = vmatpush1.bf16.msra.mxu0 %v516
        %564 = vmatprep.subr.bf16.mxu0 0
        %565 = vmatpush1.bf16.msra.mxu0 %v517
        %566 = vmatprep.mubr.bf16.mxu0 %v411
        %567 = vmatmul.mubr.bf16.gmra.mrb[0].mxu0 %v410
        %v568 = vpop.f32.mrb[0].mxu0
        %v569 = vadd.f32 0.0, %v568
        %v570 = vpop.f32.mrb[0].mxu0
        %v571 = vpop.f32.mrb[0].mxu0
        %v572 = vadd.f32 0.0, %v571
        %v573 = vpop.f32.mrb[0].mxu0
        %574 = vmatprep.mubr.bf16.mxu0 %v413
        %575 = vmatmul.mubr.bf16.gmra.mrb[0].mxu0 %v412
        %v576 = vpop.f32.mrb[0].mxu0
        %v577 = vadd.f32 0.0, %v576
        %v578 = vpop.f32.mrb[0].mxu0
        %v579 = vpop.f32.mrb[0].mxu0
        %v580 = vadd.f32 0.0, %v579
        %v581 = vpop.f32.mrb[0].mxu0
        %582 = vmatprep.mubr.bf16.mxu0 %v415
        %583 = vmatmul.mubr.bf16.gmra.mrb[0].mxu0 %v414
        %v584 = vpop.f32.mrb[0].mxu0
        %v585 = vadd.f32 0.0, %v584
        %v586 = vpop.f32.mrb[0].mxu0
        %v587 = vpop.f32.mrb[0].mxu0
        %v588 = vadd.f32 0.0, %v587
        %v589 = vpop.f32.mrb[0].mxu0
        %590 = vmatprep.mubr.bf16.mxu0 %v417
        %591 = vmatmul.mubr.bf16.gmra.mrb[0].mxu0 %v416
        %v592 = vpop.f32.mrb[0].mxu0
        %v593 = vadd.f32 0.0, %v592
        %v594 = vpop.f32.mrb[0].mxu0
        %v595 = vpop.f32.mrb[0].mxu0
        %v596 = vadd.f32 0.0, %v595
        %v597 = vpop.f32.mrb[0].mxu0
        %598 = vmatprep.mubr.bf16.mxu0 %v419
        %599 = vmatmul.mubr.bf16.gmra.mrb[0].mxu0 %v418
        %v600 = vpop.f32.mrb[0].mxu0
        %v601 = vadd.f32 0.0, %v600
        %v602 = vpop.f32.mrb[0].mxu0
        %v603 = vpop.f32.mrb[0].mxu0
        %v604 = vadd.f32 0.0, %v603
        %v605 = vpop.f32.mrb[0].mxu0
        %606 = vmatprep.mubr.bf16.mxu0 %v421
        %607 = vmatmul.mubr.bf16.gmra.mrb[0].mxu0 %v420
        %v608 = vpop.f32.mrb[0].mxu0
        %v609 = vadd.f32 0.0, %v608
        %v610 = vpop.f32.mrb[0].mxu0
        %v611 = vpop.f32.mrb[0].mxu0
        %v612 = vadd.f32 0.0, %v611
        %v613 = vpop.f32.mrb[0].mxu0
        %614 = vmatprep.mubr.bf16.mxu0 %v423
        %615 = vmatmul.mubr.bf16.gmra.mrb[0].mxu0 %v422
        %v616 = vpop.f32.mrb[0].mxu0
        %v617 = vadd.f32 0.0, %v616
        %v618 = vpop.f32.mrb[0].mxu0
        %v619 = vpop.f32.mrb[0].mxu0
        %v620 = vadd.f32 0.0, %v619
        %v621 = vpop.f32.mrb[0].mxu0
        %622 = vdwg.mxu0
        %v623 = vld [vmem:[%s239] sm:$0x1]
        %v624 = vld [vmem:[%s239 + $0x1] sm:$0x1]
        %v627 = vlaneseq
        %v628 = vshrl.u32 %v627, 7
        %v629 = vsub.s32 0, %v628
        %v630 = vrot.slane %v623, %v629
        %v631 = vlaneseq
        %v632 = vshrl.u32 %v631, 7
        %v633 = vsub.s32 0, %v632
        %v634 = vrot.slane %v624, %v633
        %v637 = vadd.f32 %v569, %v630
        %v638 = vadd.f32 %v572, %v630
        %v639 = vadd.f32 %v577, %v630
        %v640 = vadd.f32 %v580, %v630
        %v641 = vadd.f32 %v585, %v630
        %v642 = vadd.f32 %v588, %v630
        %v643 = vadd.f32 %v593, %v630
        %v644 = vadd.f32 %v596, %v634
        %v645 = vadd.f32 %v601, %v634
        %v646 = vadd.f32 %v604, %v634
        %v647 = vadd.f32 %v609, %v634
        %v648 = vadd.f32 %v612, %v634
        %v649 = vadd.f32 %v617, %v634
        %v650 = vadd.f32 %v620, %v634
        %v651 = vtanh.pop %v637
        %v652 = vtanh.pop %v638
        %v653 = vtanh.pop %v639
        %v654 = vtanh.pop %v640
        %v655 = vtanh.pop %v641
        %v656 = vtanh.pop %v642
        %v657 = vtanh.pop %v643
        %v658 = vtanh.pop %v644
        %v659 = vtanh.pop %v645
        %v660 = vtanh.pop %v646
        %v661 = vtanh.pop %v647
        %v662 = vtanh.pop %v648
        %v663 = vtanh.pop %v649
        %v664 = vtanh.pop %v650
        %v665 = vpack.c.bf16 %v652, %v651
        %v666 = vpack.c.bf16 %v654, %v653
        %v667 = vpack.c.bf16 %v656, %v655
        %v668 = vpack.c.bf16 %v658, %v657
        %v669 = vpack.c.bf16 %v660, %v659
        %v670 = vpack.c.bf16 %v662, %v661
        %v671 = vpack.c.bf16 %v664, %v663
        %v672 = vld [vmem:[#allocation8] sm:$0xff]
        %v673 = vld [vmem:[#allocation8 + $0x8] sm:$0xff]
        %v674 = vld [vmem:[#allocation8 + $0x10] sm:$0xff]
        %v675 = vld [vmem:[#allocation8 + $0x18] sm:$0xff]
        %v676 = vld [vmem:[#allocation8 + $0x20] sm:$0xff]
        %v677 = vld [vmem:[#allocation8 + $0x28] sm:$0xff]
        %v678 = vld [vmem:[#allocation8 + $0x30] sm:$0xff]
        %v679 = vld [vmem:[#allocation8 + $0x38] sm:$0xff]
        %v680 = vld [vmem:[#allocation8 + $0x40] sm:$0xff]
        %v681 = vld [vmem:[#allocation8 + $0x48] sm:$0xff]
        %v682 = vld [vmem:[#allocation8 + $0x50] sm:$0xff]
        %v683 = vld [vmem:[#allocation8 + $0x58] sm:$0xff]
        %v684 = vld [vmem:[#allocation8 + $0x60] sm:$0xff]
        %v685 = vld [vmem:[#allocation8 + $0x68] sm:$0xff]
        %v686 = vld [vmem:[#allocation8 + $0x70] sm:$0xff]
        %v687 = vld [vmem:[#allocation8 + $0x78] sm:$0xff]
        %v704 = vunpack.c.l.b16 %v672
        %v705 = vunpack.c.h.b16 %v672
        %v706 = vunpack.c.l.b16 %v673
        %v707 = vunpack.c.h.b16 %v673
        %v708 = vunpack.c.l.b16 %v674
        %v709 = vunpack.c.h.b16 %v674
        %v710 = vunpack.c.l.b16 %v675
        %v711 = vunpack.c.h.b16 %v675
        %v712 = vunpack.c.l.b16 %v676
        %v713 = vunpack.c.h.b16 %v676
        %v714 = vunpack.c.l.b16 %v677
        %v715 = vunpack.c.h.b16 %v677
        %v716 = vunpack.c.l.b16 %v678
        %v717 = vunpack.c.h.b16 %v678
        %v718 = vunpack.c.l.b16 %v679
        %v719 = vunpack.c.h.b16 %v679
        %v720 = vunpack.c.l.b16 %v680
        %v721 = vunpack.c.h.b16 %v680
        %v722 = vunpack.c.l.b16 %v681
        %v723 = vunpack.c.h.b16 %v681
        %v724 = vunpack.c.l.b16 %v682
        %v725 = vunpack.c.h.b16 %v682
        %v726 = vunpack.c.l.b16 %v683
        %v727 = vunpack.c.h.b16 %v683
        %v728 = vunpack.c.l.b16 %v684
        %v729 = vunpack.c.h.b16 %v684
        %v730 = vunpack.c.l.b16 %v685
        %v731 = vunpack.c.h.b16 %v685
        %v732 = vunpack.c.l.b16 %v686
        %v733 = vunpack.c.h.b16 %v686
        %v734 = vunpack.c.l.b16 %v687
        %v735 = vunpack.c.h.b16 %v687
        %v736 = vpack.c.b16 %v706, %v704
        %v737 = vpack.c.b16 %v707, %v705
        %v738 = vpack.c.b16 %v710, %v708
        %v739 = vpack.c.b16 %v711, %v709
        %v740 = vpack.c.b16 %v714, %v712
        %v741 = vpack.c.b16 %v715, %v713
        %v742 = vpack.c.b16 %v718, %v716
        %v743 = vpack.c.b16 %v719, %v717
        %v744 = vpack.c.b16 %v722, %v720
        %v745 = vpack.c.b16 %v723, %v721
        %v746 = vpack.c.b16 %v726, %v724
        %v747 = vpack.c.b16 %v727, %v725
        %v748 = vpack.c.b16 %v730, %v728
        %v749 = vpack.c.b16 %v731, %v729
        %v750 = vpack.c.b16 %v734, %v732
        %v751 = vpack.c.b16 %v735, %v733
        %768 = vmatprep.subr.bf16.mxu0 %v737
        %769 = vmatpush1.bf16.msra.mxu0 %v736
        %770 = vmatprep.subr.bf16.mxu0 %v739
        %771 = vmatpush1.bf16.msra.mxu0 %v738
        %772 = vmatprep.subr.bf16.mxu0 %v741
        %773 = vmatpush1.bf16.msra.mxu0 %v740
        %774 = vmatprep.subr.bf16.mxu0 %v743
        %775 = vmatpush1.bf16.msra.mxu0 %v742
        %776 = vmatprep.subr.bf16.mxu0 %v745
        %777 = vmatpush1.bf16.msra.mxu0 %v744
        %778 = vmatprep.subr.bf16.mxu0 %v747
        %779 = vmatpush1.bf16.msra.mxu0 %v746
        %780 = vmatprep.subr.bf16.mxu0 %v749
        %781 = vmatpush1.bf16.msra.mxu0 %v748
        %782 = vmatprep.subr.bf16.mxu0 %v751
        %783 = vmatpush1.bf16.msra.mxu0 %v750
        %784 = vmatprep.subr.bf16.mxu0 0
        %785 = vmatpush1.bf16.msra.mxu0 0
        %786 = vmatprep.subr.bf16.mxu0 0
        %787 = vmatpush1.bf16.msra.mxu0 0
        %788 = vmatprep.subr.bf16.mxu0 0
        %789 = vmatpush1.bf16.msra.mxu0 0
        %790 = vmatprep.subr.bf16.mxu0 0
        %791 = vmatpush1.bf16.msra.mxu0 0
        %792 = vmatprep.subr.bf16.mxu0 0
        %793 = vmatpush1.bf16.msra.mxu0 0
        %794 = vmatprep.subr.bf16.mxu0 0
        %795 = vmatpush1.bf16.msra.mxu0 0
        %796 = vmatprep.subr.bf16.mxu0 0
        %797 = vmatpush1.bf16.msra.mxu0 0
        %798 = vmatprep.subr.bf16.mxu0 0
        %799 = vmatpush1.bf16.msra.mxu0 0
        %800 = vmatprep.mubr.bf16.mxu0 0
        %801 = vmatmul.mubr.bf16.gmra.mrb[0].mxu0 %v665
        %v802 = vpop.f32.mrb[0].mxu0
        %v803 = vadd.f32 0.0, %v802
        %v804 = vpop.f32.mrb[0].mxu0
        %v805 = vadd.f32 0.0, %v804
        %v806 = vpop.f32.mrb[0].mxu0
        %v807 = vadd.f32 0.0, %v806
        %v808 = vpop.f32.mrb[0].mxu0
        %v809 = vadd.f32 0.0, %v808
        %810 = vmatprep.mubr.bf16.mxu0 0
        %811 = vmatmul.mubr.bf16.gmra.mrb[0].mxu0 %v666
        %v812 = vpop.f32.mrb[0].mxu0
        %v813 = vadd.f32 0.0, %v812
        %v814 = vpop.f32.mrb[0].mxu0
        %v815 = vadd.f32 0.0, %v814
        %v816 = vpop.f32.mrb[0].mxu0
        %v817 = vadd.f32 0.0, %v816
        %v818 = vpop.f32.mrb[0].mxu0
        %v819 = vadd.f32 0.0, %v818
        %820 = vmatprep.mubr.bf16.mxu0 0
        %821 = vmatmul.mubr.bf16.gmra.mrb[0].mxu0 %v667
        %v822 = vpop.f32.mrb[0].mxu0
        %v823 = vadd.f32 0.0, %v822
        %v824 = vpop.f32.mrb[0].mxu0
        %v825 = vadd.f32 0.0, %v824
        %v826 = vpop.f32.mrb[0].mxu0
        %v827 = vadd.f32 0.0, %v826
        %v828 = vpop.f32.mrb[0].mxu0
        %v829 = vadd.f32 0.0, %v828
        %830 = vmatprep.mubr.bf16.mxu0 0
        %831 = vmatmul.mubr.bf16.gmra.mrb[0].mxu0 %v668
        %v832 = vpop.f32.mrb[0].mxu0
        %v833 = vadd.f32 0.0, %v832
        %v834 = vpop.f32.mrb[0].mxu0
        %v835 = vadd.f32 0.0, %v834
        %v836 = vpop.f32.mrb[0].mxu0
        %v837 = vadd.f32 0.0, %v836
        %v838 = vpop.f32.mrb[0].mxu0
        %v839 = vadd.f32 0.0, %v838
        %840 = vmatprep.mubr.bf16.mxu0 0
        %841 = vmatmul.mubr.bf16.gmra.mrb[0].mxu0 %v669
        %v842 = vpop.f32.mrb[0].mxu0
        %v843 = vadd.f32 0.0, %v842
        %v844 = vpop.f32.mrb[0].mxu0
        %v845 = vadd.f32 0.0, %v844
        %v846 = vpop.f32.mrb[0].mxu0
        %v847 = vadd.f32 0.0, %v846
        %v848 = vpop.f32.mrb[0].mxu0
        %v849 = vadd.f32 0.0, %v848
        %850 = vmatprep.mubr.bf16.mxu0 0
        %851 = vmatmul.mubr.bf16.gmra.mrb[0].mxu0 %v670
        %v852 = vpop.f32.mrb[0].mxu0
        %v853 = vadd.f32 0.0, %v852
        %v854 = vpop.f32.mrb[0].mxu0
        %v855 = vadd.f32 0.0, %v854
        %v856 = vpop.f32.mrb[0].mxu0
        %v857 = vadd.f32 0.0, %v856
        %v858 = vpop.f32.mrb[0].mxu0
        %v859 = vadd.f32 0.0, %v858
        %860 = vmatprep.mubr.bf16.mxu0 0
        %861 = vmatmul.mubr.bf16.gmra.mrb[0].mxu0 %v671
        %v862 = vpop.f32.mrb[0].mxu0
        %v863 = vadd.f32 0.0, %v862
        %v864 = vpop.f32.mrb[0].mxu0
        %v865 = vadd.f32 0.0, %v864
        %v866 = vpop.f32.mrb[0].mxu0
        %v867 = vadd.f32 0.0, %v866
        %v868 = vpop.f32.mrb[0].mxu0
        %v869 = vadd.f32 0.0, %v868
        %870 = vdwg.mxu0
        %v871 = vlaneseq
        %v872 = vshrl.u32 %v871, 7
        %v873 = vadd.s32 %v872, 8
        %v874 = vadd.s32 %v872, 16
        %v875 = vadd.s32 %v872, 24
        %v876 = vadd.s32 %v872, 32
        %v877 = vadd.s32 %v872, 40
        %v878 = vadd.s32 %v872, 48
        %vm879 = vcmp.lt.s32.totalorder %v872, 49
        %vm880 = vcmp.lt.s32.totalorder %v873, 49
        %vm881 = vcmp.lt.s32.totalorder %v874, 49
        %vm882 = vcmp.lt.s32.totalorder %v875, 49
        %vm883 = vcmp.lt.s32.totalorder %v876, 49
        %vm884 = vcmp.lt.s32.totalorder %v877, 49
        %vm885 = vcmp.lt.s32.totalorder %v878, 49
        %v886 = vsel %vm879, 1, 0
        %v887 = vsel %vm880, 1, 0
        %v888 = vsel %vm881, 1, 0
        %v889 = vsel %vm882, 1, 0
        %v890 = vsel %vm883, 1, 0
        %v891 = vsel %vm884, 1, 0
        %v892 = vsel %vm885, 1, 0
        %vm893 = vcmp.eq.s32.totalorder %v886, 1
        %vm894 = vcmp.eq.s32.totalorder %v887, 1
        %vm895 = vcmp.eq.s32.totalorder %v888, 1
        %vm896 = vcmp.eq.s32.totalorder %v889, 1
        %vm897 = vcmp.eq.s32.totalorder %v890, 1
        %vm898 = vcmp.eq.s32.totalorder %v891, 1
        %vm899 = vcmp.eq.s32.totalorder %v892, 1
        %v900 = vsel %vm893, %v803, -1e+30
        %v901 = vsel %vm893, %v805, -1e+30
        %v902 = vsel %vm894, %v807, -1e+30
        %v903 = vsel %vm894, %v809, -1e+30
        %v904 = vsel %vm895, %v813, -1e+30
        %v905 = vsel %vm895, %v815, -1e+30
        %v906 = vsel %vm896, %v817, -1e+30
        %v907 = vsel %vm896, %v819, -1e+30
        %v908 = vsel %vm897, %v823, -1e+30
        %v909 = vsel %vm897, %v825, -1e+30
        %v910 = vsel %vm898, %v827, -1e+30
        %v911 = vsel %vm898, %v829, -1e+30
        %v912 = vsel %vm899, %v833, -1e+30
        %v913 = vsel %vm899, %v835, -1e+30
        %v914 = vsel %vm893, %v837, -1e+30
        %v915 = vsel %vm893, %v839, -1e+30
        %v916 = vsel %vm894, %v843, -1e+30
        %v917 = vsel %vm894, %v845, -1e+30
        %v918 = vsel %vm895, %v847, -1e+30
        %v919 = vsel %vm895, %v849, -1e+30
        %v920 = vsel %vm896, %v853, -1e+30
        %v921 = vsel %vm896, %v855, -1e+30
        %v922 = vsel %vm897, %v857, -1e+30
        %v923 = vsel %vm897, %v859, -1e+30
        %v924 = vsel %vm898, %v863, -1e+30
        %v925 = vsel %vm898, %v865, -1e+30
        %v926 = vsel %vm899, %v867, -1e+30
        %v927 = vsel %vm899, %v869, -1e+30
        %v928 = vmax.f32 %v900, %v902
        %v929 = vmax.f32 %v928, %v904
        %v930 = vmax.f32 %v929, %v906
        %v931 = vmax.f32 %v930, %v908
        %v932 = vmax.f32 %v931, %v910
        %v933 = vmax.f32 %v932, %v912
        %v934 = vrot.slane %v933, 4
        %v935 = vmax.f32 %v933, %v934
        %v936 = vrot.slane %v935, 2
        %v937 = vmax.f32 %v935, %v936
        %v938 = vrot.slane %v937, 1
        %v939 = vmax.f32 %v937, %v938
        %v940 = vmax.f32 %v901, %v903
        %v941 = vmax.f32 %v940, %v905
        %v942 = vmax.f32 %v941, %v907
        %v943 = vmax.f32 %v942, %v909
        %v944 = vmax.f32 %v943, %v911
        %v945 = vmax.f32 %v944, %v913
        %v946 = vrot.slane %v945, 4
        %v947 = vmax.f32 %v945, %v946
        %v948 = vrot.slane %v947, 2
        %v949 = vmax.f32 %v947, %v948
        %v950 = vrot.slane %v949, 1
        %v951 = vmax.f32 %v949, %v950
        %v952 = vmax.f32 %v914, %v916
        %v953 = vmax.f32 %v952, %v918
        %v954 = vmax.f32 %v953, %v920
        %v955 = vmax.f32 %v954, %v922
        %v956 = vmax.f32 %v955, %v924
        %v957 = vmax.f32 %v956, %v926
        %v958 = vrot.slane %v957, 4
        %v959 = vmax.f32 %v957, %v958
        %v960 = vrot.slane %v959, 2
        %v961 = vmax.f32 %v959, %v960
        %v962 = vrot.slane %v961, 1
        %v963 = vmax.f32 %v961, %v962
        %v964 = vmax.f32 %v915, %v917
        %v965 = vmax.f32 %v964, %v919
        %v966 = vmax.f32 %v965, %v921
        %v967 = vmax.f32 %v966, %v923
        %v968 = vmax.f32 %v967, %v925
        %v969 = vmax.f32 %v968, %v927
        %v970 = vrot.slane %v969, 4
        %v971 = vmax.f32 %v969, %v970
        %v972 = vrot.slane %v971, 2
        %v973 = vmax.f32 %v971, %v972
        %v974 = vrot.slane %v973, 1
        %v975 = vmax.f32 %v973, %v974
        %v976 = vsub.f32 %v900, %v939
        %v977 = vsub.f32 %v901, %v951
        %v978 = vsub.f32 %v902, %v939
        %v979 = vsub.f32 %v903, %v951
        %v980 = vsub.f32 %v904, %v939
        %v981 = vsub.f32 %v905, %v951
        %v982 = vsub.f32 %v906, %v939
        %v983 = vsub.f32 %v907, %v951
        %v984 = vsub.f32 %v908, %v939
        %v985 = vsub.f32 %v909, %v951
        %v986 = vsub.f32 %v910, %v939
        %v987 = vsub.f32 %v911, %v951
        %v988 = vsub.f32 %v912, %v939
        %v989 = vsub.f32 %v913, %v951
        %v990 = vsub.f32 %v914, %v963
        %v991 = vsub.f32 %v915, %v975
        %v992 = vsub.f32 %v916, %v963
        %v993 = vsub.f32 %v917, %v975
        %v994 = vsub.f32 %v918, %v963
        %v995 = vsub.f32 %v919, %v975
        %v996 = vsub.f32 %v920, %v963
        %v997 = vsub.f32 %v921, %v975
        %v998 = vsub.f32 %v922, %v963
        %v999 = vsub.f32 %v923, %v975
        %v1000 = vsub.f32 %v924, %v963
        %v1001 = vsub.f32 %v925, %v975
        %v1002 = vsub.f32 %v926, %v963
        %v1003 = vsub.f32 %v927, %v975
        %v1004 = vmul.f32 %v976, 1.442695
        %v1005 = vpow.pop %v1004
        %v1006 = vmul.f32 %v977, 1.442695
        %v1007 = vpow.pop %v1006
        %v1008 = vmul.f32 %v978, 1.442695
        %v1009 = vpow.pop %v1008
        %v1010 = vmul.f32 %v979, 1.442695
        %v1011 = vpow.pop %v1010
        %v1012 = vmul.f32 %v980, 1.442695
        %v1013 = vpow.pop %v1012
        %v1014 = vmul.f32 %v981, 1.442695
        %v1015 = vpow.pop %v1014
        %v1016 = vmul.f32 %v982, 1.442695
        %v1017 = vpow.pop %v1016
        %v1018 = vmul.f32 %v983, 1.442695
        %v1019 = vpow.pop %v1018
        %v1020 = vmul.f32 %v984, 1.442695
        %v1021 = vpow.pop %v1020
        %v1022 = vmul.f32 %v985, 1.442695
        %v1023 = vpow.pop %v1022
        %v1024 = vmul.f32 %v986, 1.442695
        %v1025 = vpow.pop %v1024
        %v1026 = vmul.f32 %v987, 1.442695
        %v1027 = vpow.pop %v1026
        %v1028 = vmul.f32 %v988, 1.442695
        %v1029 = vpow.pop %v1028
        %v1030 = vmul.f32 %v989, 1.442695
        %v1031 = vpow.pop %v1030
        %v1032 = vmul.f32 %v990, 1.442695
        %v1033 = vpow.pop %v1032
        %v1034 = vmul.f32 %v991, 1.442695
        %v1035 = vpow.pop %v1034
        %v1036 = vmul.f32 %v992, 1.442695
        %v1037 = vpow.pop %v1036
        %v1038 = vmul.f32 %v993, 1.442695
        %v1039 = vpow.pop %v1038
        %v1040 = vmul.f32 %v994, 1.442695
        %v1041 = vpow.pop %v1040
        %v1042 = vmul.f32 %v995, 1.442695
        %v1043 = vpow.pop %v1042
        %v1044 = vmul.f32 %v996, 1.442695
        %v1045 = vpow.pop %v1044
        %v1046 = vmul.f32 %v997, 1.442695
        %v1047 = vpow.pop %v1046
        %v1048 = vmul.f32 %v998, 1.442695
        %v1049 = vpow.pop %v1048
        %v1050 = vmul.f32 %v999, 1.442695
        %v1051 = vpow.pop %v1050
        %v1052 = vmul.f32 %v1000, 1.442695
        %v1053 = vpow.pop %v1052
        %v1054 = vmul.f32 %v1001, 1.442695
        %v1055 = vpow.pop %v1054
        %v1056 = vmul.f32 %v1002, 1.442695
        %v1057 = vpow.pop %v1056
        %v1058 = vmul.f32 %v1003, 1.442695
        %v1059 = vpow.pop %v1058
        %v1060 = vadd.f32 %v1005, %v1009
        %v1061 = vadd.f32 %v1060, %v1013
        %v1062 = vadd.f32 %v1061, %v1017
        %v1063 = vadd.f32 %v1062, %v1021
        %v1064 = vadd.f32 %v1063, %v1025
        %v1065 = vadd.f32 %v1064, %v1029
        %v1066 = vrot.slane %v1065, 4
        %v1067 = vadd.f32 %v1065, %v1066
        %v1068 = vrot.slane %v1067, 2
        %v1069 = vadd.f32 %v1067, %v1068
        %v1070 = vrot.slane %v1069, 1
        %v1071 = vadd.f32 %v1069, %v1070
        %v1072 = vadd.f32 %v1007, %v1011
        %v1073 = vadd.f32 %v1072, %v1015
        %v1074 = vadd.f32 %v1073, %v1019
        %v1075 = vadd.f32 %v1074, %v1023
        %v1076 = vadd.f32 %v1075, %v1027
        %v1077 = vadd.f32 %v1076, %v1031
        %v1078 = vrot.slane %v1077, 4
        %v1079 = vadd.f32 %v1077, %v1078
        %v1080 = vrot.slane %v1079, 2
        %v1081 = vadd.f32 %v1079, %v1080
        %v1082 = vrot.slane %v1081, 1
        %v1083 = vadd.f32 %v1081, %v1082
        %v1084 = vadd.f32 %v1033, %v1037
        %v1085 = vadd.f32 %v1084, %v1041
        %v1086 = vadd.f32 %v1085, %v1045
        %v1087 = vadd.f32 %v1086, %v1049
        %v1088 = vadd.f32 %v1087, %v1053
        %v1089 = vadd.f32 %v1088, %v1057
        %v1090 = vrot.slane %v1089, 4
        %v1091 = vadd.f32 %v1089, %v1090
        %v1092 = vrot.slane %v1091, 2
        %v1093 = vadd.f32 %v1091, %v1092
        %v1094 = vrot.slane %v1093, 1
        %v1095 = vadd.f32 %v1093, %v1094
        %v1096 = vadd.f32 %v1035, %v1039
        %v1097 = vadd.f32 %v1096, %v1043
        %v1098 = vadd.f32 %v1097, %v1047
        %v1099 = vadd.f32 %v1098, %v1051
        %v1100 = vadd.f32 %v1099, %v1055
        %v1101 = vadd.f32 %v1100, %v1059
        %v1102 = vrot.slane %v1101, 4
        %v1103 = vadd.f32 %v1101, %v1102
        %v1104 = vrot.slane %v1103, 2
        %v1105 = vadd.f32 %v1103, %v1104
        %v1106 = vrot.slane %v1105, 1
        %v1107 = vadd.f32 %v1105, %v1106
        %v1108 = vrcp.pop %v1071
        %v1109 = vrcp.pop %v1083
        %v1110 = vrcp.pop %v1095
        %v1111 = vrcp.pop %v1107
        %v1112 = vmul.f32 %v1005, %v1108
        %v1113 = vmul.f32 %v1007, %v1109
        %v1114 = vmul.f32 %v1009, %v1108
        %v1115 = vmul.f32 %v1011, %v1109
        %v1116 = vmul.f32 %v1013, %v1108
        %v1117 = vmul.f32 %v1015, %v1109
        %v1118 = vmul.f32 %v1017, %v1108
        %v1119 = vmul.f32 %v1019, %v1109
        %v1120 = vmul.f32 %v1021, %v1108
        %v1121 = vmul.f32 %v1023, %v1109
        %v1122 = vmul.f32 %v1025, %v1108
        %v1123 = vmul.f32 %v1027, %v1109
        %v1124 = vmul.f32 %v1029, %v1108
        %v1125 = vmul.f32 %v1031, %v1109
        %v1126 = vmul.f32 %v1033, %v1110
        %v1127 = vmul.f32 %v1035, %v1111
        %v1128 = vmul.f32 %v1037, %v1110
        %v1129 = vmul.f32 %v1039, %v1111
        %v1130 = vmul.f32 %v1041, %v1110
        %v1131 = vmul.f32 %v1043, %v1111
        %v1132 = vmul.f32 %v1045, %v1110
        %v1133 = vmul.f32 %v1047, %v1111
        %v1134 = vmul.f32 %v1049, %v1110
        %v1135 = vmul.f32 %v1051, %v1111
        %v1136 = vmul.f32 %v1053, %v1110
        %v1137 = vmul.f32 %v1055, %v1111
        %v1138 = vmul.f32 %v1057, %v1110
        %v1139 = vmul.f32 %v1059, %v1111
        %v1140 = vmul.f32 %v290, %v1112
        %v1141 = vmul.f32 %v291, %v1113
        %v1142 = vmul.f32 %v292, %v1114
        %v1143 = vmul.f32 %v293, %v1115
        %v1144 = vmul.f32 %v294, %v1116
        %v1145 = vmul.f32 %v295, %v1117
        %v1146 = vmul.f32 %v296, %v1118
        %v1147 = vmul.f32 %v297, %v1119
        %v1148 = vmul.f32 %v298, %v1120
        %v1149 = vmul.f32 %v299, %v1121
        %v1150 = vmul.f32 %v300, %v1122
        %v1151 = vmul.f32 %v301, %v1123
        %v1152 = vmul.f32 %v302, %v1124
        %v1153 = vmul.f32 %v303, %v1125
        %v1154 = vmul.f32 %v304, %v1126
        %v1155 = vmul.f32 %v305, %v1127
        %v1156 = vmul.f32 %v306, %v1128
        %v1157 = vmul.f32 %v307, %v1129
        %v1158 = vmul.f32 %v308, %v1130
        %v1159 = vmul.f32 %v309, %v1131
        %v1160 = vmul.f32 %v310, %v1132
        %v1161 = vmul.f32 %v311, %v1133
        %v1162 = vmul.f32 %v312, %v1134
        %v1163 = vmul.f32 %v313, %v1135
        %v1164 = vmul.f32 %v314, %v1136
        %v1165 = vmul.f32 %v315, %v1137
        %v1166 = vmul.f32 %v316, %v1138
        %v1167 = vmul.f32 %v317, %v1139
        %v1168 = vmax.f32 %v1140, 0.0
        %v1169 = vmax.f32 %v1141, 0.0
        %v1170 = vmax.f32 %v1142, 0.0
        %v1171 = vmax.f32 %v1143, 0.0
        %v1172 = vmax.f32 %v1144, 0.0
        %v1173 = vmax.f32 %v1145, 0.0
        %v1174 = vmax.f32 %v1146, 0.0
        %v1175 = vmax.f32 %v1147, 0.0
        %v1176 = vmax.f32 %v1148, 0.0
        %v1177 = vmax.f32 %v1149, 0.0
        %v1178 = vmax.f32 %v1150, 0.0
        %v1179 = vmax.f32 %v1151, 0.0
        %v1180 = vmax.f32 %v1152, 0.0
        %v1181 = vmax.f32 %v1153, 0.0
        %v1182 = vmax.f32 %v1154, 0.0
        %v1183 = vmax.f32 %v1155, 0.0
        %v1184 = vmax.f32 %v1156, 0.0
        %v1185 = vmax.f32 %v1157, 0.0
        %v1186 = vmax.f32 %v1158, 0.0
        %v1187 = vmax.f32 %v1159, 0.0
        %v1188 = vmax.f32 %v1160, 0.0
        %v1189 = vmax.f32 %v1161, 0.0
        %v1190 = vmax.f32 %v1162, 0.0
        %v1191 = vmax.f32 %v1163, 0.0
        %v1192 = vmax.f32 %v1164, 0.0
        %v1193 = vmax.f32 %v1165, 0.0
        %v1194 = vmax.f32 %v1166, 0.0
        %v1195 = vmax.f32 %v1167, 0.0
        %1196 = vst [vmem:[%s285] sm:$0xff] %v1168
        %1197 = vst [vmem:[%s285 + $0x8] sm:$0xff] %v1169
        %1198 = vst [vmem:[%s285 + $0x10] sm:$0xff] %v1170
        %1199 = vst [vmem:[%s285 + $0x18] sm:$0xff] %v1171
        %1200 = vst [vmem:[%s285 + $0x20] sm:$0xff] %v1172
        %1201 = vst [vmem:[%s285 + $0x28] sm:$0xff] %v1173
        %1202 = vst [vmem:[%s285 + $0x30] sm:$0xff] %v1174
        %1203 = vst [vmem:[%s285 + $0x38] sm:$0xff] %v1175
        %1204 = vst [vmem:[%s285 + $0x40] sm:$0xff] %v1176
        %1205 = vst [vmem:[%s285 + $0x48] sm:$0xff] %v1177
        %1206 = vst [vmem:[%s285 + $0x50] sm:$0xff] %v1178
        %1207 = vst [vmem:[%s285 + $0x58] sm:$0xff] %v1179
        %1208 = vst [vmem:[%s285 + $0x60] sm:$0xff] %v1180
        %1209 = vst [vmem:[%s285 + $0x68] sm:$0xff] %v1181
        %1210 = vst [vmem:[%s285 + $0x70] sm:$0xff] %v1182
        %1211 = vst [vmem:[%s285 + $0x78] sm:$0xff] %v1183
        %1212 = vst [vmem:[%s285 + $0x80] sm:$0xff] %v1184
        %1213 = vst [vmem:[%s285 + $0x88] sm:$0xff] %v1185
        %1214 = vst [vmem:[%s285 + $0x90] sm:$0xff] %v1186
        %1215 = vst [vmem:[%s285 + $0x98] sm:$0xff] %v1187
        %1216 = vst [vmem:[%s285 + $0xa0] sm:$0xff] %v1188
        %1217 = vst [vmem:[%s285 + $0xa8] sm:$0xff] %v1189
        %1218 = vst [vmem:[%s285 + $0xb0] sm:$0xff] %v1190
        %1219 = vst [vmem:[%s285 + $0xb8] sm:$0xff] %v1191
        %1220 = vst [vmem:[%s285 + $0xc0] sm:$0xff] %v1192
        %1221 = vst [vmem:[%s285 + $0xc8] sm:$0xff] %v1193
        %1222 = vst [vmem:[%s285 + $0xd0] sm:$0xff] %v1194
        %1223 = vst [vmem:[%s285 + $0xd8] sm:$0xff] %v1195
        %s1224 = sand.u32 %s127, 1
        %s1225 = scalar_lea.sflag [#allocation4], %s1224
        %s1226 = sand.u32 %s127, 1
        %s1227 = smul.addr %s1226, 224
        %s1228 = scalar_lea.vmem [#allocation10], %s1227
        // Predicated region
        $region53: #{tpu_custom_call.1} parent=35 // pred_check
          %p1229 = pneg %p137
        $region54: #{tpu_custom_call.1} parent=35 // pred_check_branch
          %1231 = sbr.rel (%p1229) target = $region56
        $region55: #{tpu_custom_call.1} parent=35 // pred_region
          %s1232 = smul.u32 2, %s25
          %s1234 = ssub.s32 3584, 3584
          %1235 = vsyncadd %s1225, %s1234
          %s1236 = smul.addr %s1232, 14
          %s1237 = smul.addr %s1236, 128
          %s1238 = scalar_lea.hbm %s4, %s1237
          %s1239 = sshll.u32 %s1228, 4
          %s1240 = int_to_ptr.vmem [resolvable:$true] %s1239
          %1245 = dma.vmem_to_hbm [thread:$0]  %s1240, 3584, %s1238, %s1225, 256, 256, 16
        $region56: #{tpu_custom_call.1} parent=35 // pred_fallthru
          _
      $region36: #{tpu_custom_call.1} parent=5 // pred_fallthru
        _
      %p1246 = scmp.le.s32.totalorder 2, %s20
      // Predicated region
      $region57: #{tpu_custom_call.1} parent=5 // pred_check
        %p1247 = pneg %p1246
      $region58: #{tpu_custom_call.1} parent=5 // pred_check_branch
        %1249 = sbr.rel (%p1247) target = $region60
      $region59: #{tpu_custom_call.1} parent=5 // pred_region
        %s1250 = ssub.s32 %s20, 2
        // Predicated region
        $region61: #{tpu_custom_call.1} parent=59 // pred_check
          %p1251 = pneg %p143
        $region62: #{tpu_custom_call.1} parent=59 // pred_check_branch
          %1253 = sbr.rel (%p1251) target = $region64
        $region63: #{tpu_custom_call.1} parent=59 // pred_region
          %s1254 = sand.u32 %s128, 1
          %s1255 = scalar_lea.sflag [#allocation4], %s1254
          %s1256 = sand.u32 %s128, 1
          %s1257 = smul.addr %s1256, 224
          %s1258 = scalar_lea.vmem [#allocation10], %s1257
          %1259 = dma.done %s1255, 3584
        $region64: #{tpu_custom_call.1} parent=59 // pred_fallthru
          _
      $region60: #{tpu_custom_call.1} parent=5 // pred_fallthru
        _
    $region6: #{tpu_custom_call.1} parent=1 // loop_footer
      %s24 = sadd.s32 1, %s20
    $region7: #{tpu_custom_call.1} parent=1 // loop_footer_branch
      %19 = sbr.rel target = $region3
    $region8: #{tpu_custom_call.1} parent=1 // loop_exit
      _
    %1260 = vsyncpa [#allocation3], 1
    %s1261 = scalar_lea.sflag [#allocation3], 1
    %1262 = vsyncpa %s1261, 1
    %1263 = vsyncpa [#allocation6], 1
    %s1264 = scalar_lea.sflag [#allocation6], 1
    %1265 = vsyncpa %s1264, 1
    %1266 = vsyncpa [#allocation9], 1
    %1267 = vsyncpa [#allocation4], 1
    %s1268 = scalar_lea.sflag [#allocation4], 1
    %1269 = vsyncpa %s1268, 1

</llo_original>
